<compile_context>
chip_gen: v7x
topology: tpu7x:2x2x1
jax: 0.10.0
libtpu: 0.0.40
codegen_flags: <defaults>
</compile_context>

<pallas_src>
import functools

import jax
import jax.numpy as jnp
from jax import lax
from jax.experimental import pallas as pl
from jax.experimental.pallas import tpu as pltpu


def _round_up(x, mult):
    return ((x + mult - 1) // mult) * mult


def _syzygy_kernel(f_max, with_debug, *refs):
    """Per-tile: MLP (Linear->tanh->Linear->tanh->Linear->Hardtanh) + syzygy."""
    if with_debug:
        (data_ref, gj_ref, g_ref, wrow_ref,
         w0_ref, b0_ref, w1_ref, b1_ref, w2_ref, b2_ref,
         comb_ref, dbg_ref) = refs
    else:
        (data_ref, gj_ref, g_ref,
         w0_ref, b0_ref, w1_ref, b1_ref, w2_ref, b2_ref,
         comb_ref) = refs

    x = data_ref[...]                      # inputs are already f32 (no casts)
    h = jnp.tanh(jnp.dot(x, w0_ref[...],
                         preferred_element_type=jnp.float32) + b0_ref[...])
    h = jnp.tanh(jnp.dot(h, w1_ref[...],
                         preferred_element_type=jnp.float32) + b1_ref[...])
    f = jnp.dot(h, w2_ref[...],
                preferred_element_type=jnp.float32) + b2_ref[...]
    f = jnp.clip(f, -f_max, f_max)         # Hardtanh(-f_max, f_max)

    gj = gj_ref[...]
    g = g_ref[...]
    m = gj.shape[-1]
    out_size = f.shape[-1]
    syz = f[:, 0:m] * gj - g

    # Single packed output tile per step: [ f_out | syz_out ].
    comb_ref[:, 0:out_size] = f.astype(comb_ref.dtype)
    comb_ref[:, out_size:out_size + m] = syz.astype(comb_ref.dtype)

    if with_debug:
        # Per-tile weighted partial sums, packed lane-dense into one row.
        w = wrow_ref[...]                  # (TM, 1) row multiplicity (0 = pad)
        s_f = jnp.sum(jnp.abs(f) * w)
        s_gj = jnp.sum(jnp.abs(gj) * w)
        s_g = jnp.sum(jnp.abs(g) * w)
        s_w = jnp.sum(w)
        lane = lax.broadcasted_iota(jnp.int32, (1, 1, 128), 2)
        packed = (jnp.where(lane == 0, s_f, 0.0)
                  + jnp.where(lane == 1, s_gj, 0.0)
                  + jnp.where(lane == 2, s_g, 0.0)
                  + jnp.where(lane == 3, s_w, 0.0))
        dbg_ref[...] = packed.astype(dbg_ref.dtype)


@functools.partial(jax.jit, static_argnames=("f_max", "with_debug", "tile_rows"))
def _run_kernel(params, data, gj_outs, g_out, row_w, *,
                f_max, with_debug, tile_rows=512):
    n, in_size = data.shape
    m = gj_outs.shape[-1]
    out_size = params["w2"].shape[-1]

    # Row tiling: TM rows per grid step (multiple of 8), batch padded to TM.
    tm = min(int(tile_rows), _round_up(max(n, 1), 8))
    n_pad = _round_up(max(n, 1), tm)
    num_tiles = n_pad // tm

    def pad_rows(x):
        return jnp.pad(x, ((0, n_pad - n), (0, 0))) if n_pad > n else x

    row_spec = lambda feat: pl.BlockSpec((tm, feat), lambda i: (i, 0))
    # Resident weights/biases: full-array block, constant index_map => the DMA
    # is elided after the first grid step.
    const_spec = lambda shp: pl.BlockSpec(shp, lambda i: (0, 0))

    in_specs = [row_spec(in_size), row_spec(m), row_spec(m)]
    inputs = [pad_rows(data), pad_rows(gj_outs), pad_rows(g_out)]
    if with_debug:
        in_specs.append(row_spec(1))
        inputs.append(pad_rows(row_w.reshape(n, 1)))
    for name in ("w0", "b0", "w1", "b1", "w2", "b2"):
        in_specs.append(const_spec(params[name].shape))
        inputs.append(params[name])

    out_shape = [jax.ShapeDtypeStruct((n_pad, out_size + m), jnp.float32)]
    out_specs = [pl.BlockSpec((tm, out_size + m), lambda i: (i, 0))]
    if with_debug:
        out_shape.append(jax.ShapeDtypeStruct((num_tiles, 1, 128), jnp.float32))
        out_specs.append(pl.BlockSpec((1, 1, 128), lambda i: (i, 0, 0)))

    kernel = functools.partial(_syzygy_kernel, float(f_max), with_debug)
    outs = pl.pallas_call(
        kernel,
        grid=(num_tiles,),
        in_specs=in_specs,
        out_specs=tuple(out_specs),
        out_shape=tuple(out_shape),
        compiler_params=pltpu.CompilerParams(
            dimension_semantics=("parallel",)),
    )(*inputs)

    if with_debug:
        comb, dbg = outs
        sums = jnp.sum(dbg, axis=(0, 1))          # (128,) lane-wise totals
        dbg_out = (sums[0], sums[1], sums[2], sums[3])
    else:
        (comb,) = outs
        dbg_out = None

    f_full = comb[:n, :out_size]
    syz_full = comb[:n, out_size:out_size + m]
    return f_full, syz_full, dbg_out


def restricted_syzygy_forward(params, f_max, data, gj_outs, gjs_on_means,
                              g_out, dbg_dict=None):
    """Mirrors RestrictedSyzygy.forward: returns (syz_out, f_out, n_kept)."""
    n, m = gj_outs.shape
    with_debug = dbg_dict is not None

    # Static-shape mask mirroring keep_intersection:
    #   masked = where(|gj| < gjs_on_means.min(), gj, 0); nonzero(masked)
    thresh = jnp.min(gjs_on_means)
    nz = (jnp.abs(gj_outs) < thresh) & (gj_outs != 0)
    row_counts = jnp.sum(nz, axis=-1)
    total = jnp.sum(row_counts)
    # Per-row multiplicity for the debug means; if nothing is kept the
    # reference falls back to the full batch (weight 1 per real row).
    row_w = jnp.where(total > 0, row_counts.astype(jnp.float32),
                      jnp.ones((n,), jnp.float32))

    f_full, syz_full, dbg = _run_kernel(
        params, data, gj_outs, g_out, row_w,
        f_max=float(f_max), with_debug=with_debug)

    n_kept = int(total)  # the reference returns this data-dependent count
    if n_kept > 0:
        # TODO(synk): torch.nonzero-style dynamic-shape gather must stay in
        # eager JAX glue; the Pallas call above is shape-static regardless.
        keep_ids = jnp.nonzero(nz)[0]
        f_out = f_full[keep_ids]
        syz_out = syz_full[keep_ids]
    else:
        print('Warning: RestrictedSyzygy.keep_intersection would be empty')
        f_out = f_full
        syz_out = syz_full

    if with_debug:
        s_f, s_gj, s_g, s_w = dbg
        dbg_dict['syz_fwd_f_out'] = s_f / (s_w * f_full.shape[-1])
        dbg_dict['syz_fwd_gj_outs'] = s_gj / (s_w * m)
        dbg_dict['syz_fwd_g_out'] = s_g / (s_w * m)

    return syz_out, f_out, n_kept


def init_mlp_params(key, in_size, hl_output_sizes, out_size):
    """Deterministic nn.Linear-style init (U(-1/sqrt(fan_in), 1/sqrt(fan_in)))."""
    sizes = [in_size] + list(hl_output_sizes) + [out_size]
    params = {}
    for i in range(len(sizes) - 1):
        fan_in, fan_out = sizes[i], sizes[i + 1]
        key, kw, kb = jax.random.split(key, 3)
        bound = 1.0 / float(fan_in) ** 0.5
        # stored pre-transposed: [in, out]  (PyTorch stores [out, in])
        params[f"w{i}"] = jax.random.uniform(
            kw, (fan_in, fan_out), jnp.float32, -bound, bound)
        params[f"b{i}"] = jax.random.uniform(
            kb, (1, fan_out), jnp.float32, -bound, bound)
    return params


def _ref_mlp(params, f_max, x, gj, g):
    h = jnp.tanh(x @ params["w0"] + params["b0"])
    h = jnp.tanh(h @ params["w1"] + params["b1"])
    f = jnp.clip(h @ params["w2"] + params["b2"], -f_max, f_max)
    syz = f[:, :gj.shape[-1]] * gj - g
    return f, syz


if __name__ == "__main__":
    # RestrictedSyzygy(in_size=16, hl_output_sizes=[32, 32], nl=Tanh, k=5,
    #                  f_max=1.0) -> MLP 16 -> 32 -> 32 -> (k-1)=4
    in_size = 16
    hl_output_sizes = [32, 32]
    k = 5
    f_max = 1.0
    batch = 8

    key = jax.random.PRNGKey(0)
    k_params, k_data, k_gj, k_gm, k_g = jax.random.split(key, 5)

    params = init_mlp_params(k_params, in_size, hl_output_sizes, k - 1)

    data = jax.random.normal(k_data, (batch, in_size), jnp.float32)
    gj_outs = 0.5 * jax.random.normal(k_gj, (batch, 1), jnp.float32)
    gjs_on_means = 1.0 + jnp.abs(jax.random.normal(k_gm, (batch, 1), jnp.float32))
    g_out = jax.random.normal(k_g, (batch, 1), jnp.float32)

    dbg_dict = {}
    syz_out, f_out, n_keep = restricted_syzygy_forward(
        params, f_max, data, gj_outs, gjs_on_means, g_out, dbg_dict)

    jax.block_until_ready((syz_out, f_out,
                           dbg_dict['syz_fwd_f_out'],
                           dbg_dict['syz_fwd_gj_outs'],
                           dbg_dict['syz_fwd_g_out']))

    # Pure-JAX reference check (same keep_intersection semantics).
    nz = (jnp.abs(gj_outs) < jnp.min(gjs_on_means)) & (gj_outs != 0)
    ids = jnp.nonzero(nz)[0]
    if ids.shape[0] > 0:
        d_r, gj_r, g_r = data[ids], gj_outs[ids], g_out[ids]
    else:
        d_r, gj_r, g_r = data, gj_outs, g_out
    f_ref, syz_ref = _ref_mlp(params, f_max, d_r, gj_r, g_r)

    expected_rows = n_keep if n_keep > 0 else batch
    assert syz_out.shape == (expected_rows, gj_outs.shape[-1])
    assert f_out.shape == (expected_rows, k - 1)
    assert bool(jnp.all(jnp.abs(f_out) <= f_max + 1e-6))
    assert bool(jnp.allclose(f_out, f_ref, atol=1e-5))
    assert bool(jnp.allclose(syz_out, syz_ref, atol=1e-5))
    assert bool(jnp.allclose(dbg_dict['syz_fwd_f_out'],
                             jnp.mean(jnp.abs(f_ref)), atol=1e-5))
    assert bool(jnp.allclose(dbg_dict['syz_fwd_gj_outs'],
                             jnp.mean(jnp.abs(gj_r)), atol=1e-5))
    assert bool(jnp.allclose(dbg_dict['syz_fwd_g_out'],
                             jnp.mean(jnp.abs(g_r)), atol=1e-5))

    print("KERNEL_OK")
</pallas_src>

<mosaic_0001>
module attributes {stable_mosaic.version = 11 : i64} {
  func.func @_syzygy_kernel(%arg0: i32, %arg1: memref<8x16xf32, #tpu.memory_space<vmem>>, %arg2: memref<8x1xf32, #tpu.memory_space<vmem>>, %arg3: memref<8x1xf32, #tpu.memory_space<vmem>>, %arg4: memref<8x1xf32, #tpu.memory_space<vmem>>, %arg5: memref<16x32xf32, #tpu.memory_space<vmem>>, %arg6: memref<1x32xf32, #tpu.memory_space<vmem>>, %arg7: memref<32x32xf32, #tpu.memory_space<vmem>>, %arg8: memref<1x32xf32, #tpu.memory_space<vmem>>, %arg9: memref<32x4xf32, #tpu.memory_space<vmem>>, %arg10: memref<1x4xf32, #tpu.memory_space<vmem>>, %arg11: memref<8x5xf32, #tpu.memory_space<vmem>>, %arg12: memref<1x1x128xf32, #tpu.memory_space<vmem>>) attributes {dimension_semantics = [#tpu.dimension_semantics<parallel>], iteration_bounds = array<i64: 1>, scalar_prefetch = 0 : i64, scratch_operands = 0 : i64, tpu.core_type = #tpu.core_type<tc>, window_params = [{transform_indices = @transform_0, window_bounds = array<i64: 8, 16>}, {transform_indices = @transform_1, window_bounds = array<i64: 8, 1>}, {transform_indices = @transform_2, window_bounds = array<i64: 8, 1>}, {transform_indices = @transform_3, window_bounds = array<i64: 8, 1>}, {pipeline_mode = #tpu.pipeline_mode<synchronous>, transform_indices = @transform_4, window_bounds = array<i64: 16, 32>}, {pipeline_mode = #tpu.pipeline_mode<synchronous>, transform_indices = @transform_5, window_bounds = array<i64: 1, 32>}, {pipeline_mode = #tpu.pipeline_mode<synchronous>, transform_indices = @transform_6, window_bounds = array<i64: 32, 32>}, {pipeline_mode = #tpu.pipeline_mode<synchronous>, transform_indices = @transform_7, window_bounds = array<i64: 1, 32>}, {pipeline_mode = #tpu.pipeline_mode<synchronous>, transform_indices = @transform_8, window_bounds = array<i64: 32, 4>}, {pipeline_mode = #tpu.pipeline_mode<synchronous>, transform_indices = @transform_9, window_bounds = array<i64: 1, 4>}, {transform_indices = @transform_10, window_bounds = array<i64: 8, 5>}, {transform_indices = @transform_11, window_bounds = array<i64: 1, 1, 128>}]} {
    %c0 = arith.constant 0 : index
    %c0_0 = arith.constant 0 : index
    %0 = vector.load %arg1[%c0, %c0_0] : memref<8x16xf32, #tpu.memory_space<vmem>>, vector<8x16xf32>
    %c0_1 = arith.constant 0 : index
    %c0_2 = arith.constant 0 : index
    %1 = vector.load %arg5[%c0_1, %c0_2] : memref<16x32xf32, #tpu.memory_space<vmem>>, vector<16x32xf32>
    %cst = arith.constant dense<0.000000e+00> : vector<8x32xf32>
    %2 = tpu.matmul %0, %1, %cst {dimension_numbers = #tpu.dot_dimension_numbers<[1], [0], [0], [1], [0, 0, 1, 1], [], []>} : vector<8x16xf32>, vector<16x32xf32>, vector<8x32xf32> -> vector<8x32xf32>
    %c0_3 = arith.constant 0 : index
    %c0_4 = arith.constant 0 : index
    %3 = vector.load %arg6[%c0_3, %c0_4] : memref<1x32xf32, #tpu.memory_space<vmem>>, vector<1x32xf32>
    %4 = vector.broadcast %3 : vector<1x32xf32> to vector<8x32xf32>
    %5 = arith.addf %2, %4 : vector<8x32xf32>
    %6 = math.tanh %5 : vector<8x32xf32>
    %c0_5 = arith.constant 0 : index
    %c0_6 = arith.constant 0 : index
    %7 = vector.load %arg7[%c0_5, %c0_6] : memref<32x32xf32, #tpu.memory_space<vmem>>, vector<32x32xf32>
    %cst_7 = arith.constant dense<0.000000e+00> : vector<8x32xf32>
    %8 = tpu.matmul %6, %7, %cst_7 {dimension_numbers = #tpu.dot_dimension_numbers<[1], [0], [0], [1], [0, 0, 1, 1], [], []>} : vector<8x32xf32>, vector<32x32xf32>, vector<8x32xf32> -> vector<8x32xf32>
    %c0_8 = arith.constant 0 : index
    %c0_9 = arith.constant 0 : index
    %9 = vector.load %arg8[%c0_8, %c0_9] : memref<1x32xf32, #tpu.memory_space<vmem>>, vector<1x32xf32>
    %10 = vector.broadcast %9 : vector<1x32xf32> to vector<8x32xf32>
    %11 = arith.addf %8, %10 : vector<8x32xf32>
    %12 = math.tanh %11 : vector<8x32xf32>
    %c0_10 = arith.constant 0 : index
    %c0_11 = arith.constant 0 : index
    %13 = vector.load %arg9[%c0_10, %c0_11] : memref<32x4xf32, #tpu.memory_space<vmem>>, vector<32x4xf32>
    %cst_12 = arith.constant dense<0.000000e+00> : vector<8x4xf32>
    %14 = tpu.matmul %12, %13, %cst_12 {dimension_numbers = #tpu.dot_dimension_numbers<[1], [0], [0], [1], [0, 0, 1, 1], [], []>} : vector<8x32xf32>, vector<32x4xf32>, vector<8x4xf32> -> vector<8x4xf32>
    %c0_13 = arith.constant 0 : index
    %c0_14 = arith.constant 0 : index
    %15 = vector.load %arg10[%c0_13, %c0_14] : memref<1x4xf32, #tpu.memory_space<vmem>>, vector<1x4xf32>
    %16 = vector.broadcast %15 : vector<1x4xf32> to vector<8x4xf32>
    %17 = arith.addf %14, %16 : vector<8x4xf32>
    %cst_15 = arith.constant -1.000000e+00 : f32
    %cst_16 = arith.constant 1.000000e+00 : f32
    %18 = vector.broadcast %cst_15 : f32 to vector<8x4xf32>
    %19 = arith.maximumf %18, %17 : vector<8x4xf32>
    %20 = vector.broadcast %cst_16 : f32 to vector<8x4xf32>
    %21 = arith.minimumf %20, %19 : vector<8x4xf32>
    %c0_17 = arith.constant 0 : index
    %c0_18 = arith.constant 0 : index
    %22 = vector.load %arg2[%c0_17, %c0_18] : memref<8x1xf32, #tpu.memory_space<vmem>>, vector<8x1xf32>
    %c0_19 = arith.constant 0 : index
    %c0_20 = arith.constant 0 : index
    %23 = vector.load %arg3[%c0_19, %c0_20] : memref<8x1xf32, #tpu.memory_space<vmem>>, vector<8x1xf32>
    %24 = vector.extract_strided_slice %21 {offsets = [0, 0], sizes = [8, 1], strides = [1, 1]} : vector<8x4xf32> to vector<8x1xf32>
    %25 = arith.mulf %24, %22 : vector<8x1xf32>
    %26 = arith.subf %25, %23 : vector<8x1xf32>
    %c0_21 = arith.constant 0 : index
    %c0_22 = arith.constant 0 : index
    %27 = vector.load %arg11[%c0_21, %c0_22] : memref<8x5xf32, #tpu.memory_space<vmem>>, vector<8x4xf32>
    tpu.vector_store %arg11[%c0_21, %c0_22], %21 {strides = array<i32>} : memref<8x5xf32, #tpu.memory_space<vmem>>, vector<8x4xf32>,
    %c0_23 = arith.constant 0 : index
    %c4 = arith.constant 4 : index
    %28 = vector.load %arg11[%c0_23, %c4] : memref<8x5xf32, #tpu.memory_space<vmem>>, vector<8x1xf32>
    tpu.vector_store %arg11[%c0_23, %c4], %26 {strides = array<i32>} : memref<8x5xf32, #tpu.memory_space<vmem>>, vector<8x1xf32>,
    %c0_24 = arith.constant 0 : index
    %c0_25 = arith.constant 0 : index
    %29 = vector.load %arg4[%c0_24, %c0_25] : memref<8x1xf32, #tpu.memory_space<vmem>>, vector<8x1xf32>
    %30 = math.absf %21 : vector<8x4xf32>
    %31 = vector.broadcast %29 : vector<8x1xf32> to vector<8x4xf32>
    %32 = arith.mulf %30, %31 : vector<8x4xf32>
    %33 = vector.shape_cast %32 : vector<8x4xf32> to vector<1x8x4xf32>
    %cst_26 = arith.constant dense<0.000000e+00> : vector<1xf32>
    %34 = vector.multi_reduction <add>, %33, %cst_26 [1, 2] : vector<1x8x4xf32> to vector<1xf32>
    %35 = vector.shape_cast %34 : vector<1xf32> to vector<1x1x1xf32>
    %36 = vector.extract %35[0, 0, 0] : f32 from vector<1x1x1xf32>
    %37 = math.absf %22 : vector<8x1xf32>
    %38 = arith.mulf %37, %29 : vector<8x1xf32>
    %39 = vector.shape_cast %38 : vector<8x1xf32> to vector<1x8x1xf32>
    %cst_27 = arith.constant dense<0.000000e+00> : vector<1xf32>
    %40 = vector.multi_reduction <add>, %39, %cst_27 [1, 2] : vector<1x8x1xf32> to vector<1xf32>
    %41 = vector.shape_cast %40 : vector<1xf32> to vector<1x1x1xf32>
    %42 = vector.extract %41[0, 0, 0] : f32 from vector<1x1x1xf32>
    %43 = math.absf %23 : vector<8x1xf32>
    %44 = arith.mulf %43, %29 : vector<8x1xf32>
    %45 = vector.shape_cast %44 : vector<8x1xf32> to vector<1x8x1xf32>
    %cst_28 = arith.constant dense<0.000000e+00> : vector<1xf32>
    %46 = vector.multi_reduction <add>, %45, %cst_28 [1, 2] : vector<1x8x1xf32> to vector<1xf32>
    %47 = vector.shape_cast %46 : vector<1xf32> to vector<1x1x1xf32>
    %48 = vector.extract %47[0, 0, 0] : f32 from vector<1x1x1xf32>
    %49 = vector.shape_cast %29 : vector<8x1xf32> to vector<1x8x1xf32>
    %cst_29 = arith.constant dense<0.000000e+00> : vector<1xf32>
    %50 = vector.multi_reduction <add>, %49, %cst_29 [1, 2] : vector<1x8x1xf32> to vector<1xf32>
    %51 = vector.shape_cast %50 : vector<1xf32> to vector<1x1x1xf32>
    %52 = vector.extract %51[0, 0, 0] : f32 from vector<1x1x1xf32>
    %53 = tpu.iota {dimensions = array<i32: 2>} : vector<1x1x128xi32>
    %c0_i32 = arith.constant 0 : i32
    %54 = vector.broadcast %c0_i32 : i32 to vector<1x1x128xi32>
    %55 = arith.cmpi eq, %53, %54 : vector<1x1x128xi32>
    %cst_30 = arith.constant 0.000000e+00 : f32
    %56 = vector.broadcast %36 : f32 to vector<1x1x128xf32>
    %57 = vector.broadcast %cst_30 : f32 to vector<1x1x128xf32>
    %58 = arith.select %55, %56, %57 : vector<1x1x128xi1>, vector<1x1x128xf32>
    %c1_i32 = arith.constant 1 : i32
    %59 = vector.broadcast %c1_i32 : i32 to vector<1x1x128xi32>
    %60 = arith.cmpi eq, %53, %59 : vector<1x1x128xi32>
    %cst_31 = arith.constant 0.000000e+00 : f32
    %61 = vector.broadcast %42 : f32 to vector<1x1x128xf32>
    %62 = vector.broadcast %cst_31 : f32 to vector<1x1x128xf32>
    %63 = arith.select %60, %61, %62 : vector<1x1x128xi1>, vector<1x1x128xf32>
    %64 = arith.addf %58, %63 : vector<1x1x128xf32>
    %c2_i32 = arith.constant 2 : i32
    %65 = vector.broadcast %c2_i32 : i32 to vector<1x1x128xi32>
    %66 = arith.cmpi eq, %53, %65 : vector<1x1x128xi32>
    %cst_32 = arith.constant 0.000000e+00 : f32
    %67 = vector.broadcast %48 : f32 to vector<1x1x128xf32>
    %68 = vector.broadcast %cst_32 : f32 to vector<1x1x128xf32>
    %69 = arith.select %66, %67, %68 : vector<1x1x128xi1>, vector<1x1x128xf32>
    %70 = arith.addf %64, %69 : vector<1x1x128xf32>
    %c3_i32 = arith.constant 3 : i32
    %71 = vector.broadcast %c3_i32 : i32 to vector<1x1x128xi32>
    %72 = arith.cmpi eq, %53, %71 : vector<1x1x128xi32>
    %cst_33 = arith.constant 0.000000e+00 : f32
    %73 = vector.broadcast %52 : f32 to vector<1x1x128xf32>
    %74 = vector.broadcast %cst_33 : f32 to vector<1x1x128xf32>
    %75 = arith.select %72, %73, %74 : vector<1x1x128xi1>, vector<1x1x128xf32>
    %76 = arith.addf %70, %75 : vector<1x1x128xf32>
    %c0_34 = arith.constant 0 : index
    %c0_35 = arith.constant 0 : index
    %c0_36 = arith.constant 0 : index
    %77 = vector.load %arg12[%c0_34, %c0_35, %c0_36] : memref<1x1x128xf32, #tpu.memory_space<vmem>>, vector<1x1x128xf32>
    tpu.vector_store %arg12[%c0_34, %c0_35, %c0_36], %76 {strides = array<i32>} : memref<1x1x128xf32, #tpu.memory_space<vmem>>, vector<1x1x128xf32>,
    return
  }
  func.func @transform_0(%arg0: i32) -> (i32, i32) {
    %c0_i32 = arith.constant 0 : i32
    %c0_i32_0 = arith.constant 0 : i32
    return %arg0, %c0_i32 : i32, i32
  }
  func.func @transform_1(%arg0: i32) -> (i32, i32) {
    %c0_i32 = arith.constant 0 : i32
    %c0_i32_0 = arith.constant 0 : i32
    return %arg0, %c0_i32 : i32, i32
  }
  func.func @transform_2(%arg0: i32) -> (i32, i32) {
    %c0_i32 = arith.constant 0 : i32
    %c0_i32_0 = arith.constant 0 : i32
    return %arg0, %c0_i32 : i32, i32
  }
  func.func @transform_3(%arg0: i32) -> (i32, i32) {
    %c0_i32 = arith.constant 0 : i32
    %c0_i32_0 = arith.constant 0 : i32
    return %arg0, %c0_i32 : i32, i32
  }
  func.func @transform_4(%arg0: i32) -> (i32, i32) {
    %c0_i32 = arith.constant 0 : i32
    %c0_i32_0 = arith.constant 0 : i32
    %c0_i32_1 = arith.constant 0 : i32
    return %c0_i32, %c0_i32_0 : i32, i32
  }
  func.func @transform_5(%arg0: i32) -> (i32, i32) {
    %c0_i32 = arith.constant 0 : i32
    %c0_i32_0 = arith.constant 0 : i32
    %c0_i32_1 = arith.constant 0 : i32
    return %c0_i32, %c0_i32_0 : i32, i32
  }
  func.func @transform_6(%arg0: i32) -> (i32, i32) {
    %c0_i32 = arith.constant 0 : i32
    %c0_i32_0 = arith.constant 0 : i32
    %c0_i32_1 = arith.constant 0 : i32
    return %c0_i32, %c0_i32_0 : i32, i32
  }
  func.func @transform_7(%arg0: i32) -> (i32, i32) {
    %c0_i32 = arith.constant 0 : i32
    %c0_i32_0 = arith.constant 0 : i32
    %c0_i32_1 = arith.constant 0 : i32
    return %c0_i32, %c0_i32_0 : i32, i32
  }
  func.func @transform_8(%arg0: i32) -> (i32, i32) {
    %c0_i32 = arith.constant 0 : i32
    %c0_i32_0 = arith.constant 0 : i32
    %c0_i32_1 = arith.constant 0 : i32
    return %c0_i32, %c0_i32_0 : i32, i32
  }
  func.func @transform_9(%arg0: i32) -> (i32, i32) {
    %c0_i32 = arith.constant 0 : i32
    %c0_i32_0 = arith.constant 0 : i32
    %c0_i32_1 = arith.constant 0 : i32
    return %c0_i32, %c0_i32_0 : i32, i32
  }
  func.func @transform_10(%arg0: i32) -> (i32, i32) {
    %c0_i32 = arith.constant 0 : i32
    %c0_i32_0 = arith.constant 0 : i32
    return %arg0, %c0_i32 : i32, i32
  }
  func.func @transform_11(%arg0: i32) -> (i32, i32, i32) {
    %c0_i32 = arith.constant 0 : i32
    %c0_i32_0 = arith.constant 0 : i32
    %c0_i32_1 = arith.constant 0 : i32
    return %arg0, %c0_i32, %c0_i32_0 : i32, i32, i32
  }
}

</mosaic_0001>

<llo_original>
// kernel: _run_kernel.1
$region0: #{_run_kernel.1}
  #allocation0 [shape = 'u32[]', space=smem, size = 0x4, offset = 0x4, fixed_abs, tag = 'smem constant byte address 0x4 - core index']
  #allocation1 [shape = 'u32[144,128]{1,0:T(1,128)}', space=vmem, size = 0x12000, scoped, tag = 'internal scratch']
  %s0 = inlined_call_operand.vmem [shape: f32[8,16], index: 0, kind: input, shape index: {}]
  %s1 = inlined_call_operand.vmem [shape: f32[8,1], index: 1, kind: input, shape index: {}]
  %s2 = inlined_call_operand.vmem [shape: f32[8,1], index: 2, kind: input, shape index: {}]
  %s3 = inlined_call_operand.vmem [shape: f32[8,1], index: 3, kind: input, shape index: {}]
  %s4 = inlined_call_operand.vmem [shape: f32[16,32], index: 4, kind: input, shape index: {}]
  %s5 = inlined_call_operand.vmem [shape: f32[1,32], index: 5, kind: input, shape index: {}]
  %s6 = inlined_call_operand.vmem [shape: f32[32,32], index: 6, kind: input, shape index: {}]
  %s7 = inlined_call_operand.vmem [shape: f32[1,32], index: 7, kind: input, shape index: {}]
  %s8 = inlined_call_operand.vmem [shape: f32[32,4], index: 8, kind: input, shape index: {}]
  %s9 = inlined_call_operand.vmem [shape: f32[1,4], index: 9, kind: input, shape index: {}]
  %s10 = inlined_call_operand.vmem [shape: f32[8,5], index: 10, kind: output, shape index: {0}]
  %s11 = inlined_call_operand.vmem [shape: f32[1,1,128], index: 11, kind: output, shape index: {1}]
  %12 = xla_tuple %s10, %s11
  %s13 = sld [smem:[#allocation0]]
  $region58: #{_run_kernel.1} parent=0
    _
  %s15 = ssub.s32 1, %s13
  %s16 = scalar_select 0, %s15, %s13
  // Predicated region
  $region2: #{_run_kernel.1} parent=0 // pred_check
    _
  $region3: #{_run_kernel.1} parent=0 // pred_check_branch
    %18 = sbr.rel (0) target = $region5
  $region4: #{_run_kernel.1} parent=0 // pred_region
    _
  $region5: #{_run_kernel.1} parent=0 // pred_fallthru
    _
  // Predicated region
  $region6: #{_run_kernel.1} parent=0 // pred_check
    _
  $region7: #{_run_kernel.1} parent=0 // pred_check_branch
    %20 = sbr.rel (0) target = $region9
  $region8: #{_run_kernel.1} parent=0 // pred_region
    _
  $region9: #{_run_kernel.1} parent=0 // pred_fallthru
    _
  // Predicated region
  $region10: #{_run_kernel.1} parent=0 // pred_check
    _
  $region11: #{_run_kernel.1} parent=0 // pred_check_branch
    %22 = sbr.rel (0) target = $region13
  $region12: #{_run_kernel.1} parent=0 // pred_region
    _
  $region13: #{_run_kernel.1} parent=0 // pred_fallthru
    _
  // Predicated region
  $region14: #{_run_kernel.1} parent=0 // pred_check
    _
  $region15: #{_run_kernel.1} parent=0 // pred_check_branch
    %24 = sbr.rel (0) target = $region17
  $region16: #{_run_kernel.1} parent=0 // pred_region
    _
  $region17: #{_run_kernel.1} parent=0 // pred_fallthru
    _
  // Predicated region
  $region18: #{_run_kernel.1} parent=0 // pred_check
    _
  $region19: #{_run_kernel.1} parent=0 // pred_check_branch
    %26 = sbr.rel (0) target = $region21
  $region20: #{_run_kernel.1} parent=0 // pred_region
    _
  $region21: #{_run_kernel.1} parent=0 // pred_fallthru
    _
  // Predicated region
  $region22: #{_run_kernel.1} parent=0 // pred_check
    _
  $region23: #{_run_kernel.1} parent=0 // pred_check_branch
    %28 = sbr.rel (0) target = $region25
  $region24: #{_run_kernel.1} parent=0 // pred_region
    _
  $region25: #{_run_kernel.1} parent=0 // pred_fallthru
    _
  // Predicated region
  $region26: #{_run_kernel.1} parent=0 // pred_check
    _
  $region27: #{_run_kernel.1} parent=0 // pred_check_branch
    %30 = sbr.rel (0) target = $region29
  $region28: #{_run_kernel.1} parent=0 // pred_region
    _
  $region29: #{_run_kernel.1} parent=0 // pred_fallthru
    _
  // Predicated region
  $region30: #{_run_kernel.1} parent=0 // pred_check
    _
  $region31: #{_run_kernel.1} parent=0 // pred_check_branch
    %32 = sbr.rel (0) target = $region33
  $region32: #{_run_kernel.1} parent=0 // pred_region
    _
  $region33: #{_run_kernel.1} parent=0 // pred_fallthru
    _
  // Predicated region
  $region34: #{_run_kernel.1} parent=0 // pred_check
    _
  $region35: #{_run_kernel.1} parent=0 // pred_check_branch
    %34 = sbr.rel (0) target = $region37
  $region36: #{_run_kernel.1} parent=0 // pred_region
    _
  $region37: #{_run_kernel.1} parent=0 // pred_fallthru
    _
  // Predicated region
  $region38: #{_run_kernel.1} parent=0 // pred_check
    _
  $region39: #{_run_kernel.1} parent=0 // pred_check_branch
    %36 = sbr.rel (0) target = $region41
  $region40: #{_run_kernel.1} parent=0 // pred_region
    _
  $region41: #{_run_kernel.1} parent=0 // pred_fallthru
    _
  %v37 = vld [vmem:[%s0] sm:$0xff]
  %v38 = vld [vmem:[%s4] sm:$0xff]
  %v39 = vld [vmem:[%s4 + $0x8] sm:$0xff]
  %v40 = vld [vmem:[%s5] sm:$0x1]
  %v42 = vlaneseq
  %v43 = vshrl.u32 %v42, 7
  %v44 = vsub.s32 0, %v43
  %v45 = vrot.slane %v40, %v44
  %vm47 = vcmask 130048
  %v49 = vsel %vm47, %v37, 0
  %51 = vmatprep.subr.mxu0 0.0
  %52 = vmatpush1.msra.mxu0 %v38
  %53 = vmatprep.subr.mxu0 0.0
  %54 = vmatpush1.msra.mxu0 %v39
  %55 = vmatprep.subr.mxu0 0.0
  %56 = vmatpush1.msra.mxu0 0.0
  %57 = vmatprep.subr.mxu0 0.0
  %58 = vmatpush1.msra.mxu0 0.0
  %59 = vmatprep.subr.mxu0 0.0
  %60 = vmatpush1.msra.mxu0 0.0
  %61 = vmatprep.subr.mxu0 0.0
  %62 = vmatpush1.msra.mxu0 0.0
  %63 = vmatprep.subr.mxu0 0.0
  %64 = vmatpush1.msra.mxu0 0.0
  %65 = vmatprep.subr.mxu0 0.0
  %66 = vmatpush1.msra.mxu0 0.0
  %67 = vmatprep.subr.mxu0 0.0
  %68 = vmatpush1.msra.mxu0 0.0
  %69 = vmatprep.subr.mxu0 0.0
  %70 = vmatpush1.msra.mxu0 0.0
  %71 = vmatprep.subr.mxu0 0.0
  %72 = vmatpush1.msra.mxu0 0.0
  %73 = vmatprep.subr.mxu0 0.0
  %74 = vmatpush1.msra.mxu0 0.0
  %75 = vmatprep.subr.mxu0 0.0
  %76 = vmatpush1.msra.mxu0 0.0
  %77 = vmatprep.subr.mxu0 0.0
  %78 = vmatpush1.msra.mxu0 0.0
  %79 = vmatprep.subr.mxu0 0.0
  %80 = vmatpush1.msra.mxu0 0.0
  %81 = vmatprep.subr.mxu0 0.0
  %82 = vmatpush1.msra.mxu0 0.0
  %83 = vmatprep.subr.mxu0 0.0
  %84 = vmatpush1.msra.mxu0 0.0
  %85 = vmatprep.subr.mxu0 0.0
  %86 = vmatpush1.msra.mxu0 0.0
  %87 = vmatprep.subr.mxu0 0.0
  %88 = vmatpush1.msra.mxu0 0.0
  %89 = vmatprep.subr.mxu0 0.0
  %90 = vmatpush1.msra.mxu0 0.0
  %91 = vmatprep.subr.mxu0 0.0
  %92 = vmatpush1.msra.mxu0 0.0
  %93 = vmatprep.subr.mxu0 0.0
  %94 = vmatpush1.msra.mxu0 0.0
  %95 = vmatprep.subr.mxu0 0.0
  %96 = vmatpush1.msra.mxu0 0.0
  %97 = vmatprep.subr.mxu0 0.0
  %98 = vmatpush1.msra.mxu0 0.0
  %99 = vmatprep.subr.mxu0 0.0
  %100 = vmatpush1.msra.mxu0 0.0
  %101 = vmatprep.subr.mxu0 0.0
  %102 = vmatpush1.msra.mxu0 0.0
  %103 = vmatprep.subr.mxu0 0.0
  %104 = vmatpush1.msra.mxu0 0.0
  %105 = vmatprep.subr.mxu0 0.0
  %106 = vmatpush1.msra.mxu0 0.0
  %107 = vmatprep.subr.mxu0 0.0
  %108 = vmatpush1.msra.mxu0 0.0
  %109 = vmatprep.subr.mxu0 0.0
  %110 = vmatpush1.msra.mxu0 0.0
  %111 = vmatprep.subr.mxu0 0.0
  %112 = vmatpush1.msra.mxu0 0.0
  %113 = vmatprep.subr.mxu0 0.0
  %114 = vmatpush1.msra.mxu0 0.0
  %115 = vmatprep.mubr.f32.mxu0 0.0
  %116 = vmatmul.mubr.f32.gmra.mrb[0].mxu0 %v49
  %v117 = vpop.f32.mrb[0].mxu0
  %v118 = vadd.f32 %v45, %v117
  %v119 = vpop.f32.mrb[0].mxu0
  %120 = vdwg.mxu0
  %v121 = vtanh.pop %v118
  %v122 = vld [vmem:[%s6] sm:$0xff]
  %v123 = vld [vmem:[%s6 + $0x8] sm:$0xff]
  %v124 = vld [vmem:[%s6 + $0x10] sm:$0xff]
  %v125 = vld [vmem:[%s6 + $0x18] sm:$0xff]
  %v126 = vld [vmem:[%s7] sm:$0x1]
  %v128 = vlaneseq
  %v129 = vshrl.u32 %v128, 7
  %v130 = vsub.s32 0, %v129
  %v131 = vrot.slane %v126, %v130
  %vm133 = vcmask 261120
  %v135 = vsel %vm133, %v121, 0
  %137 = vmatprep.subr.mxu0 0.0
  %138 = vmatpush1.msra.mxu0 %v122
  %139 = vmatprep.subr.mxu0 0.0
  %140 = vmatpush1.msra.mxu0 %v123
  %141 = vmatprep.subr.mxu0 0.0
  %142 = vmatpush1.msra.mxu0 %v124
  %143 = vmatprep.subr.mxu0 0.0
  %144 = vmatpush1.msra.mxu0 %v125
  %145 = vmatprep.subr.mxu0 0.0
  %146 = vmatpush1.msra.mxu0 0.0
  %147 = vmatprep.subr.mxu0 0.0
  %148 = vmatpush1.msra.mxu0 0.0
  %149 = vmatprep.subr.mxu0 0.0
  %150 = vmatpush1.msra.mxu0 0.0
  %151 = vmatprep.subr.mxu0 0.0
  %152 = vmatpush1.msra.mxu0 0.0
  %153 = vmatprep.subr.mxu0 0.0
  %154 = vmatpush1.msra.mxu0 0.0
  %155 = vmatprep.subr.mxu0 0.0
  %156 = vmatpush1.msra.mxu0 0.0
  %157 = vmatprep.subr.mxu0 0.0
  %158 = vmatpush1.msra.mxu0 0.0
  %159 = vmatprep.subr.mxu0 0.0
  %160 = vmatpush1.msra.mxu0 0.0
  %161 = vmatprep.subr.mxu0 0.0
  %162 = vmatpush1.msra.mxu0 0.0
  %163 = vmatprep.subr.mxu0 0.0
  %164 = vmatpush1.msra.mxu0 0.0
  %165 = vmatprep.subr.mxu0 0.0
  %166 = vmatpush1.msra.mxu0 0.0
  %167 = vmatprep.subr.mxu0 0.0
  %168 = vmatpush1.msra.mxu0 0.0
  %169 = vmatprep.subr.mxu0 0.0
  %170 = vmatpush1.msra.mxu0 0.0
  %171 = vmatprep.subr.mxu0 0.0
  %172 = vmatpush1.msra.mxu0 0.0
  %173 = vmatprep.subr.mxu0 0.0
  %174 = vmatpush1.msra.mxu0 0.0
  %175 = vmatprep.subr.mxu0 0.0
  %176 = vmatpush1.msra.mxu0 0.0
  %177 = vmatprep.subr.mxu0 0.0
  %178 = vmatpush1.msra.mxu0 0.0
  %179 = vmatprep.subr.mxu0 0.0
  %180 = vmatpush1.msra.mxu0 0.0
  %181 = vmatprep.subr.mxu0 0.0
  %182 = vmatpush1.msra.mxu0 0.0
  %183 = vmatprep.subr.mxu0 0.0
  %184 = vmatpush1.msra.mxu0 0.0
  %185 = vmatprep.subr.mxu0 0.0
  %186 = vmatpush1.msra.mxu0 0.0
  %187 = vmatprep.subr.mxu0 0.0
  %188 = vmatpush1.msra.mxu0 0.0
  %189 = vmatprep.subr.mxu0 0.0
  %190 = vmatpush1.msra.mxu0 0.0
  %191 = vmatprep.subr.mxu0 0.0
  %192 = vmatpush1.msra.mxu0 0.0
  %193 = vmatprep.subr.mxu0 0.0
  %194 = vmatpush1.msra.mxu0 0.0
  %195 = vmatprep.subr.mxu0 0.0
  %196 = vmatpush1.msra.mxu0 0.0
  %197 = vmatprep.subr.mxu0 0.0
  %198 = vmatpush1.msra.mxu0 0.0
  %199 = vmatprep.subr.mxu0 0.0
  %200 = vmatpush1.msra.mxu0 0.0
  %201 = vmatprep.mubr.f32.mxu0 0.0
  %202 = vmatmul.mubr.f32.gmra.mrb[0].mxu0 %v135
  %v203 = vpop.f32.mrb[0].mxu0
  %v204 = vadd.f32 %v131, %v203
  %v205 = vpop.f32.mrb[0].mxu0
  %206 = vdwg.mxu0
  %v207 = vtanh.pop %v204
  %v208 = vld [vmem:[%s8] sm:$0xff]
  %v209 = vld [vmem:[%s8 + $0x8] sm:$0xff]
  %v210 = vld [vmem:[%s8 + $0x10] sm:$0xff]
  %v211 = vld [vmem:[%s8 + $0x18] sm:$0xff]
  %v212 = vld [vmem:[%s9] sm:$0x1]
  %v214 = vlaneseq
  %v215 = vshrl.u32 %v214, 7
  %v216 = vsub.s32 0, %v215
  %v217 = vrot.slane %v212, %v216
  %v220 = vsel %vm133, %v207, 0
  %222 = vmatprep.subr.mxu0 0.0
  %223 = vmatpush1.msra.mxu0 %v208
  %224 = vmatprep.subr.mxu0 0.0
  %225 = vmatpush1.msra.mxu0 %v209
  %226 = vmatprep.subr.mxu0 0.0
  %227 = vmatpush1.msra.mxu0 %v210
  %228 = vmatprep.subr.mxu0 0.0
  %229 = vmatpush1.msra.mxu0 %v211
  %230 = vmatprep.subr.mxu0 0.0
  %231 = vmatpush1.msra.mxu0 0.0
  %232 = vmatprep.subr.mxu0 0.0
  %233 = vmatpush1.msra.mxu0 0.0
  %234 = vmatprep.subr.mxu0 0.0
  %235 = vmatpush1.msra.mxu0 0.0
  %236 = vmatprep.subr.mxu0 0.0
  %237 = vmatpush1.msra.mxu0 0.0
  %238 = vmatprep.subr.mxu0 0.0
  %239 = vmatpush1.msra.mxu0 0.0
  %240 = vmatprep.subr.mxu0 0.0
  %241 = vmatpush1.msra.mxu0 0.0
  %242 = vmatprep.subr.mxu0 0.0
  %243 = vmatpush1.msra.mxu0 0.0
  %244 = vmatprep.subr.mxu0 0.0
  %245 = vmatpush1.msra.mxu0 0.0
  %246 = vmatprep.subr.mxu0 0.0
  %247 = vmatpush1.msra.mxu0 0.0
  %248 = vmatprep.subr.mxu0 0.0
  %249 = vmatpush1.msra.mxu0 0.0
  %250 = vmatprep.subr.mxu0 0.0
  %251 = vmatpush1.msra.mxu0 0.0
  %252 = vmatprep.subr.mxu0 0.0
  %253 = vmatpush1.msra.mxu0 0.0
  %254 = vmatprep.subr.mxu0 0.0
  %255 = vmatpush1.msra.mxu0 0.0
  %256 = vmatprep.subr.mxu0 0.0
  %257 = vmatpush1.msra.mxu0 0.0
  %258 = vmatprep.subr.mxu0 0.0
  %259 = vmatpush1.msra.mxu0 0.0
  %260 = vmatprep.subr.mxu0 0.0
  %261 = vmatpush1.msra.mxu0 0.0
  %262 = vmatprep.subr.mxu0 0.0
  %263 = vmatpush1.msra.mxu0 0.0
  %264 = vmatprep.subr.mxu0 0.0
  %265 = vmatpush1.msra.mxu0 0.0
  %266 = vmatprep.subr.mxu0 0.0
  %267 = vmatpush1.msra.mxu0 0.0
  %268 = vmatprep.subr.mxu0 0.0
  %269 = vmatpush1.msra.mxu0 0.0
  %270 = vmatprep.subr.mxu0 0.0
  %271 = vmatpush1.msra.mxu0 0.0
  %272 = vmatprep.subr.mxu0 0.0
  %273 = vmatpush1.msra.mxu0 0.0
  %274 = vmatprep.subr.mxu0 0.0
  %275 = vmatpush1.msra.mxu0 0.0
  %276 = vmatprep.subr.mxu0 0.0
  %277 = vmatpush1.msra.mxu0 0.0
  %278 = vmatprep.subr.mxu0 0.0
  %279 = vmatpush1.msra.mxu0 0.0
  %280 = vmatprep.subr.mxu0 0.0
  %281 = vmatpush1.msra.mxu0 0.0
  %282 = vmatprep.subr.mxu0 0.0
  %283 = vmatpush1.msra.mxu0 0.0
  %284 = vmatprep.subr.mxu0 0.0
  %285 = vmatpush1.msra.mxu0 0.0
  %286 = vmatprep.mubr.f32.mxu0 0.0
  %287 = vmatmul.mubr.f32.gmra.mrb[0].mxu0 %v220
  %v288 = vpop.f32.mrb[0].mxu0
  %v289 = vadd.f32 %v217, %v288
  %v290 = vpop.f32.mrb[0].mxu0
  %291 = vdwg.mxu0
  %v292 = vmax.f32 %v289, -1.0
  %v293 = vmin.f32 %v292, 1.0
  %v294 = vld [vmem:[%s1] sm:$0xff]
  %v295 = vld [vmem:[%s2] sm:$0xff]
  %v296 = vmul.f32 %v293, %v294
  %v297 = vsub.f32 %v296, %v295
  %vm298 = vcmask 31744
  %299 = vst.msk [vmem:[%s10] sm:$0xff] %vm298, %v293
  %301 = vrot.lane.b32.xlu0 %v297, 4
  %v302 = vpop.permute.xlu0 %301
  %vm304 = vcmask 39968
  %305 = vst.msk [vmem:[%s10] sm:$0xff] %vm304, %v302
  %v306 = vld [vmem:[%s3] sm:$0xff]
  %v307 = vand.u32 2147483647, %v293
  %309 = vset.pattern.permute.xlu0 0
  %310 = vperm.xlu0 %309, %v306
  %v311 = vpop.permute.xlu0 %310
  %v313 = vmul.f32 %v307, %v311
  %v314 = vsel %vm298, %v313, 0.0
  %315 = vadd.xlane.f32.xlu0 %v314
  %v316 = vpop.xlane.xlu0 %315
  %v317 = vrot.slane %v316, 4
  %v318 = vadd.f32 %v316, %v317
  %v319 = vrot.slane %v318, 2
  %v320 = vadd.f32 %v318, %v319
  %v321 = vrot.slane %v320, 1
  %v322 = vadd.f32 %v320, %v321
  %s323 = vtos %v322
  %v324 = vand.u32 2147483647, %v294
  %v325 = vmul.f32 %v324, %v306
  %vm326 = vcmask 7168
  %v327 = vsel %vm326, %v325, 0.0
  %328 = vadd.xlane.f32.xlu0 %v327
  %v329 = vpop.xlane.xlu0 %328
  %v330 = vrot.slane %v329, 4
  %v331 = vadd.f32 %v329, %v330
  %v332 = vrot.slane %v331, 2
  %v333 = vadd.f32 %v331, %v332
  %v334 = vrot.slane %v333, 1
  %v335 = vadd.f32 %v333, %v334
  %s336 = vtos %v335
  %v337 = vand.u32 2147483647, %v295
  %v338 = vmul.f32 %v337, %v306
  %v339 = vsel %vm326, %v338, 0.0
  %340 = vadd.xlane.f32.xlu0 %v339
  %v341 = vpop.xlane.xlu0 %340
  %v342 = vrot.slane %v341, 4
  %v343 = vadd.f32 %v341, %v342
  %v344 = vrot.slane %v343, 2
  %v345 = vadd.f32 %v343, %v344
  %v346 = vrot.slane %v345, 1
  %v347 = vadd.f32 %v345, %v346
  %s348 = vtos %v347
  %v349 = vsel %vm326, %v306, 0.0
  %350 = vadd.xlane.f32.xlu0 %v349
  %v351 = vpop.xlane.xlu0 %350
  %v352 = vrot.slane %v351, 4
  %v353 = vadd.f32 %v351, %v352
  %v354 = vrot.slane %v353, 2
  %v355 = vadd.f32 %v353, %v354
  %v356 = vrot.slane %v355, 1
  %v357 = vadd.f32 %v355, %v356
  %s358 = vtos %v357
  %v359 = vlaneseq
  %v360 = vand.u32 %v359, 127
  %vm361 = vcmp.eq.s32.totalorder %v360, 0
  %v362 = vstv %s323
  %v363 = vsel %vm361, %v362, 0.0
  %vm364 = vcmp.eq.s32.totalorder %v360, 1
  %v365 = vstv %s336
  %v366 = vsel %vm364, %v365, 0.0
  %v367 = vadd.f32 %v363, %v366
  %vm368 = vcmp.eq.s32.totalorder %v360, 2
  %v369 = vstv %s348
  %v370 = vsel %vm368, %v369, 0.0
  %v371 = vadd.f32 %v367, %v370
  %vm372 = vcmp.eq.s32.totalorder %v360, 3
  %v373 = vstv %s358
  %v374 = vsel %vm372, %v373, 0.0
  %v375 = vadd.f32 %v371, %v374
  %376 = vst [vmem:[%s11] sm:$0x1] %v375
  // Predicated region
  $region42: #{_run_kernel.1} parent=0 // pred_check
    _
  $region43: #{_run_kernel.1} parent=0 // pred_check_branch
    %378 = sbr.rel (0) target = $region45
  $region44: #{_run_kernel.1} parent=0 // pred_region
    _
  $region45: #{_run_kernel.1} parent=0 // pred_fallthru
    _
  // Predicated region
  $region46: #{_run_kernel.1} parent=0 // pred_check
    _
  $region47: #{_run_kernel.1} parent=0 // pred_check_branch
    %380 = sbr.rel (0) target = $region49
  $region48: #{_run_kernel.1} parent=0 // pred_region
    _
  $region49: #{_run_kernel.1} parent=0 // pred_fallthru
    _
  // Predicated region
  $region50: #{_run_kernel.1} parent=0 // pred_check
    _
  $region51: #{_run_kernel.1} parent=0 // pred_check_branch
    %382 = sbr.rel (0) target = $region53
  $region52: #{_run_kernel.1} parent=0 // pred_region
    _
  $region53: #{_run_kernel.1} parent=0 // pred_fallthru
    _
  // Predicated region
  $region54: #{_run_kernel.1} parent=0 // pred_check
    _
  $region55: #{_run_kernel.1} parent=0 // pred_check_branch
    %384 = sbr.rel (0) target = $region57
  $region56: #{_run_kernel.1} parent=0 // pred_region
    _
  $region57: #{_run_kernel.1} parent=0 // pred_fallthru
    _

</llo_original>
